<compile_context>
chip_gen: v7x
topology: tpu7x:2x2x1
jax: 0.10.0
libtpu: 0.0.40
codegen_flags: <defaults>
</compile_context>

<pallas_src>
import jax
import jax.numpy as jnp
from jax.experimental import pallas as pl
from jax.experimental.pallas import tpu as pltpu


def _attention_kernel(enc_ref, dec_ref, w_ctx_t_ref, w_dec_t_ref, b_ref,
                      out_ref, attn_ref):
    # Per-step tiles: enc [1, S_enc, H] (resident per batch), dec [1, TQ, H].
    enc = enc_ref[0]          # [S_enc, H]
    dec = dec_ref[0]          # [TQ, H]

    # scores[q, k] = sum_h dec[q, h] * enc[k, h]  (contraction over H; the MXU
    # consumes the RHS natively -- no materialized transpose).
    scores = jax.lax.dot_general(
        dec, enc,
        dimension_numbers=(((1,), (1,)), ((), ())),
        preferred_element_type=jnp.float32)          # [TQ, S_enc]

    # Softmax over the key axis (PyTorch Softmax(dim=2)), max-subtracted.
    # Exact reciprocal (one per row, EUP + Newton) so the returned attention
    # rows sum to 1 to f32 precision -- the approximate path is not worth the
    # visible ~1e-4 error on a user-facing output.
    m = jnp.max(scores, axis=-1, keepdims=True)
    e = jnp.exp(scores - m)
    inv = pl.reciprocal(jnp.sum(e, axis=-1, keepdims=True), approx=False)
    attn = e * inv                                   # [TQ, S_enc], f32

    # context = attn @ enc -> [TQ, H].  Cast attn to the encoder dtype so
    # bf16 inputs hit the full-rate bf16 MXU path (f32 accumulation); this is
    # a no-op for f32 inputs.
    ctx = jnp.dot(attn.astype(enc.dtype), enc,
                  preferred_element_type=jnp.float32)

    # Linear on concat([ctx, dec]) split into two matmuls (weights already
    # transposed + dtype-matched host-side), then tanh.  b_ref is [1, H] f32.
    lin = (jnp.dot(ctx.astype(w_ctx_t_ref.dtype), w_ctx_t_ref[...],
                   preferred_element_type=jnp.float32)
           + jnp.dot(dec, w_dec_t_ref[...], preferred_element_type=jnp.float32)
           + b_ref[...])
    out_ref[0] = jnp.tanh(lin).astype(out_ref.dtype)
    attn_ref[0] = attn.astype(attn_ref.dtype)


def _tq_sublane_multiple(itemsize: int) -> int:
    # Second-to-last block dim must be a multiple of the packed sublane count:
    # 8 for 4-byte, 16 for 2-byte, 32 for 1-byte dtypes.
    return 8 * max(1, 4 // max(1, itemsize))


def _vmem_limit_bytes() -> int:
    """Generation-gated scoped-VMEM limit: ~0.75 x capacity, capped at 100 MiB.

    v5e/v6e (128 MiB) -> 96 MiB; v7x (64 MiB) -> 48 MiB.  Falls back to the
    v7x-safe 48 MiB if the hardware query is unavailable.
    """
    try:
        cap = pltpu.get_tpu_info().vmem_capacity_bytes
    except Exception:
        cap = 64 * 1024 * 1024
    return min(int(0.75 * cap), 100 * 1024 * 1024)


def _block_bytes(tq, s_enc, h, io_bytes, attn_bytes):
    """Estimated VMEM footprint for one grid step, assuming the pipeline
    double-buffers every operand, plus the live f32 intermediates."""
    enc = 2 * s_enc * h * io_bytes                      # resident encoder block
    dec_out = 2 * 2 * tq * h * io_bytes                 # dec in + out blocks
    attn = 2 * tq * s_enc * attn_bytes                  # attn out block
    weights = 2 * (2 * h * h * io_bytes + 8 * 128 * 4)  # W_ctx^T + W_dec^T + bias (padded)
    live = 2 * tq * s_enc * 4 + 2 * tq * h * 4          # scores/exp + ctx f32 temporaries
    return enc + dec_out + attn + weights + live


def _choose_tq(batch, s_dec, s_enc, h, io_bytes, attn_bytes, budget_bytes):
    """Largest sublane-aligned divisor of s_dec whose working set fits the
    VMEM budget.  Full-extent blocks are exempt from alignment, so a
    non-divisible s_dec simply falls back to the untiled block."""
    mult = max(_tq_sublane_multiple(io_bytes), _tq_sublane_multiple(attn_bytes))
    if s_dec % mult != 0:
        return s_dec
    cands = [d for d in range(s_dec, 0, -1) if s_dec % d == 0 and d % mult == 0]
    if not cands:
        return s_dec
    # With a degenerate batch, keep >= 2 query tiles so both v7x TensorCores
    # get grid work (the encoder block is re-fetched per tile; acceptable).
    if batch == 1 and any(d < s_dec for d in cands):
        cands = [d for d in cands if d < s_dec]
    for tq in cands:
        if _block_bytes(tq, s_enc, h, io_bytes, attn_bytes) <= budget_bytes:
            return tq
    return cands[-1]   # best effort: smallest aligned tile


def attention_forward(encoder_output, decoder_output, weight, bias,
                      attn_dtype=None):
    """encoder_output: [B, S_enc, H], decoder_output: [B, S_dec, H]
    weight: [H, 2H] (PyTorch nn.Linear layout), bias: [H].

    attn_dtype: optional dtype for the returned attention probabilities.
    Pass jnp.bfloat16 to halve the dominant B*S_dec*S_enc HBM writeback when
    full-precision probabilities are not needed."""
    B, S_enc, H = encoder_output.shape
    _, S_dec, _ = decoder_output.shape

    io_dtype = decoder_output.dtype
    attn_dtype = jnp.dtype(attn_dtype) if attn_dtype is not None else jnp.dtype(io_dtype)

    # Pre-transpose (and dtype-match) the weight halves once, host-side, so
    # the kernel does no per-iteration transposes or mixed-dtype matmuls.
    w_ctx_t = weight[:, :H].T.astype(io_dtype)      # [H, H]  == W_ctx^T
    w_dec_t = weight[:, H:].T.astype(io_dtype)      # [H, H]  == W_dec^T
    b2d = bias.reshape(1, H).astype(jnp.float32)    # [1, H]

    vmem_limit = _vmem_limit_bytes()
    io_bytes = jnp.dtype(io_dtype).itemsize
    attn_bytes = attn_dtype.itemsize
    TQ = _choose_tq(B, S_dec, S_enc, H, io_bytes, attn_bytes,
                    budget_bytes=int(0.9 * vmem_limit))
    n_q = max(1, S_dec // TQ)

    out, attn = pl.pallas_call(
        _attention_kernel,
        out_shape=(
            jax.ShapeDtypeStruct((B, S_dec, H), io_dtype),
            jax.ShapeDtypeStruct((B, S_dec, S_enc), attn_dtype),
        ),
        grid_spec=pltpu.PrefetchScalarGridSpec(
            num_scalar_prefetch=0,
            grid=(B, n_q),
            in_specs=[
                # Encoder block is resident across the query-tile axis.
                pl.BlockSpec((1, S_enc, H), lambda b, q: (b, 0, 0)),
                pl.BlockSpec((1, TQ, H), lambda b, q: (b, q, 0)),
                pl.BlockSpec((H, H), lambda b, q: (0, 0)),
                pl.BlockSpec((H, H), lambda b, q: (0, 0)),
                pl.BlockSpec((1, H), lambda b, q: (0, 0)),
            ],
            out_specs=[
                pl.BlockSpec((1, TQ, H), lambda b, q: (b, q, 0)),
                pl.BlockSpec((1, TQ, S_enc), lambda b, q: (b, q, 0)),
            ],
        ),
        compiler_params=pltpu.CompilerParams(
            dimension_semantics=("parallel", "parallel"),
            vmem_limit_bytes=vmem_limit,
        ),
    )(encoder_output.astype(io_dtype), decoder_output, w_ctx_t, w_dec_t, b2d)
    return out, attn


def _reference(encoder_output, decoder_output, weight, bias):
    # Pure-JAX reference mirroring the PyTorch forward.
    attn = jnp.einsum('bqh,bkh->bqk', decoder_output, encoder_output)
    attn = jax.nn.softmax(attn, axis=2)
    context = jnp.einsum('bqk,bkh->bqh', attn, encoder_output)
    cat = jnp.concatenate([context, decoder_output], axis=2)
    out = jnp.tanh(jnp.einsum('bqc,hc->bqh', cat, weight) + bias)
    return out, attn


if __name__ == "__main__":
    B, S_enc, S_dec, H = 2, 8, 8, 32

    key = jax.random.PRNGKey(0)
    k_enc, k_dec, k_w, k_b = jax.random.split(key, 4)

    encoder_output = jax.random.normal(k_enc, (B, S_enc, H), dtype=jnp.float32)
    decoder_output = jax.random.normal(k_dec, (B, S_dec, H), dtype=jnp.float32)

    # nn.Linear(2H, H): weight [H, 2H], bias [H], uniform(-1/sqrt(2H), 1/sqrt(2H))
    bound = 1.0 / jnp.sqrt(2.0 * H)
    weight = jax.random.uniform(k_w, (H, 2 * H), minval=-bound, maxval=bound,
                                dtype=jnp.float32)
    bias = jax.random.uniform(k_b, (H,), minval=-bound, maxval=bound,
                              dtype=jnp.float32)

    out, attn = attention_forward(encoder_output, decoder_output, weight, bias)
    jax.block_until_ready((out, attn))

    ref_out, ref_attn = _reference(encoder_output, decoder_output, weight, bias)
    # Exact softmax normalization now; remaining error is matmul rounding.
    assert jnp.allclose(out, ref_out, atol=1e-3, rtol=1e-3)
    assert jnp.allclose(attn, ref_attn, atol=1e-3, rtol=1e-3)

    print("KERNEL_OK")
</pallas_src>

<mosaic_0001>
module attributes {stable_mosaic.version = 11 : i64} {
  func.func @_attention_kernel(%arg0: i32, %arg1: i32, %arg2: memref<1x8x32xf32, #tpu.memory_space<vmem>>, %arg3: memref<1x8x32xf32, #tpu.memory_space<vmem>>, %arg4: memref<32x32xf32, #tpu.memory_space<vmem>>, %arg5: memref<32x32xf32, #tpu.memory_space<vmem>>, %arg6: memref<1x32xf32, #tpu.memory_space<vmem>>, %arg7: memref<1x8x32xf32, #tpu.memory_space<vmem>>, %arg8: memref<1x8x8xf32, #tpu.memory_space<vmem>>) attributes {dimension_semantics = [#tpu.dimension_semantics<parallel>, #tpu.dimension_semantics<parallel>], iteration_bounds = array<i64: 2, 1>, scalar_prefetch = 0 : i64, scratch_operands = 0 : i64, tpu.core_type = #tpu.core_type<tc>, window_params = [{transform_indices = @transform_0, window_bounds = array<i64: 1, 8, 32>}, {transform_indices = @transform_1, window_bounds = array<i64: 1, 8, 32>}, {pipeline_mode = #tpu.pipeline_mode<synchronous>, transform_indices = @transform_2, window_bounds = array<i64: 32, 32>}, {pipeline_mode = #tpu.pipeline_mode<synchronous>, transform_indices = @transform_3, window_bounds = array<i64: 32, 32>}, {pipeline_mode = #tpu.pipeline_mode<synchronous>, transform_indices = @transform_4, window_bounds = array<i64: 1, 32>}, {transform_indices = @transform_5, window_bounds = array<i64: 1, 8, 32>}, {transform_indices = @transform_6, window_bounds = array<i64: 1, 8, 8>}]} {
    %c0 = arith.constant 0 : index
    %c0_0 = arith.constant 0 : index
    %c0_1 = arith.constant 0 : index
    %0 = vector.load %arg2[%c0, %c0_0, %c0_1] : memref<1x8x32xf32, #tpu.memory_space<vmem>>, vector<1x8x32xf32>
    %1 = vector.shape_cast %0 : vector<1x8x32xf32> to vector<8x32xf32>
    %c0_2 = arith.constant 0 : index
    %c0_3 = arith.constant 0 : index
    %c0_4 = arith.constant 0 : index
    %2 = vector.load %arg3[%c0_2, %c0_3, %c0_4] : memref<1x8x32xf32, #tpu.memory_space<vmem>>, vector<1x8x32xf32>
    %3 = vector.shape_cast %2 : vector<1x8x32xf32> to vector<8x32xf32>
    %cst = arith.constant dense<0.000000e+00> : vector<8x8xf32>
    %4 = tpu.matmul %3, %1, %cst {dimension_numbers = #tpu.dot_dimension_numbers<[1], [1], [0], [0], [0, 0, 1, 0], [], []>} : vector<8x32xf32>, vector<8x32xf32>, vector<8x8xf32> -> vector<8x8xf32>
    %cst_5 = arith.constant dense<0xFF800000> : vector<8xf32>
    %5 = vector.multi_reduction <maximumf>, %4, %cst_5 [1] : vector<8x8xf32> to vector<8xf32>
    %6 = vector.shape_cast %5 : vector<8xf32> to vector<8x1xf32>
    %7 = vector.broadcast %6 : vector<8x1xf32> to vector<8x8xf32>
    %8 = arith.subf %4, %7 : vector<8x8xf32>
    %9 = math.exp %8 : vector<8x8xf32>
    %cst_6 = arith.constant dense<0.000000e+00> : vector<8xf32>
    %10 = vector.multi_reduction <add>, %9, %cst_6 [1] : vector<8x8xf32> to vector<8xf32>
    %11 = vector.shape_cast %10 : vector<8xf32> to vector<8x1xf32>
    %12 = tpu.reciprocal %11 : vector<8x1xf32> -> vector<8x1xf32>
    %13 = vector.broadcast %12 : vector<8x1xf32> to vector<8x8xf32>
    %14 = arith.mulf %9, %13 : vector<8x8xf32>
    %cst_7 = arith.constant dense<0.000000e+00> : vector<8x32xf32>
    %15 = tpu.matmul %14, %1, %cst_7 {dimension_numbers = #tpu.dot_dimension_numbers<[1], [0], [0], [1], [0, 0, 1, 1], [], []>} : vector<8x8xf32>, vector<8x32xf32>, vector<8x32xf32> -> vector<8x32xf32>
    %c0_8 = arith.constant 0 : index
    %c0_9 = arith.constant 0 : index
    %16 = vector.load %arg4[%c0_8, %c0_9] : memref<32x32xf32, #tpu.memory_space<vmem>>, vector<32x32xf32>
    %cst_10 = arith.constant dense<0.000000e+00> : vector<8x32xf32>
    %17 = tpu.matmul %15, %16, %cst_10 {dimension_numbers = #tpu.dot_dimension_numbers<[1], [0], [0], [1], [0, 0, 1, 1], [], []>} : vector<8x32xf32>, vector<32x32xf32>, vector<8x32xf32> -> vector<8x32xf32>
    %c0_11 = arith.constant 0 : index
    %c0_12 = arith.constant 0 : index
    %18 = vector.load %arg5[%c0_11, %c0_12] : memref<32x32xf32, #tpu.memory_space<vmem>>, vector<32x32xf32>
    %cst_13 = arith.constant dense<0.000000e+00> : vector<8x32xf32>
    %19 = tpu.matmul %3, %18, %cst_13 {dimension_numbers = #tpu.dot_dimension_numbers<[1], [0], [0], [1], [0, 0, 1, 1], [], []>} : vector<8x32xf32>, vector<32x32xf32>, vector<8x32xf32> -> vector<8x32xf32>
    %20 = arith.addf %17, %19 : vector<8x32xf32>
    %c0_14 = arith.constant 0 : index
    %c0_15 = arith.constant 0 : index
    %21 = vector.load %arg6[%c0_14, %c0_15] : memref<1x32xf32, #tpu.memory_space<vmem>>, vector<1x32xf32>
    %22 = vector.broadcast %21 : vector<1x32xf32> to vector<8x32xf32>
    %23 = arith.addf %20, %22 : vector<8x32xf32>
    %24 = math.tanh %23 : vector<8x32xf32>
    %c0_16 = arith.constant 0 : index
    %c0_17 = arith.constant 0 : index
    %c0_18 = arith.constant 0 : index
    %25 = vector.load %arg7[%c0_16, %c0_17, %c0_18] : memref<1x8x32xf32, #tpu.memory_space<vmem>>, vector<1x8x32xf32>
    %26 = vector.shape_cast %25 : vector<1x8x32xf32> to vector<8x32xf32>
    %27 = vector.shape_cast %24 : vector<8x32xf32> to vector<1x8x32xf32>
    tpu.vector_store %arg7[%c0_16, %c0_17, %c0_18], %27 {strides = array<i32>} : memref<1x8x32xf32, #tpu.memory_space<vmem>>, vector<1x8x32xf32>,
    %c0_19 = arith.constant 0 : index
    %c0_20 = arith.constant 0 : index
    %c0_21 = arith.constant 0 : index
    %28 = vector.load %arg8[%c0_19, %c0_20, %c0_21] : memref<1x8x8xf32, #tpu.memory_space<vmem>>, vector<1x8x8xf32>
    %29 = vector.shape_cast %28 : vector<1x8x8xf32> to vector<8x8xf32>
    %30 = vector.shape_cast %14 : vector<8x8xf32> to vector<1x8x8xf32>
    tpu.vector_store %arg8[%c0_19, %c0_20, %c0_21], %30 {strides = array<i32>} : memref<1x8x8xf32, #tpu.memory_space<vmem>>, vector<1x8x8xf32>,
    return
  }
  func.func @transform_0(%arg0: i32, %arg1: i32) -> (i32, i32, i32) {
    %c0_i32 = arith.constant 0 : i32
    %c0_i32_0 = arith.constant 0 : i32
    %c0_i32_1 = arith.constant 0 : i32
    return %arg0, %c0_i32, %c0_i32_0 : i32, i32, i32
  }
  func.func @transform_1(%arg0: i32, %arg1: i32) -> (i32, i32, i32) {
    %c0_i32 = arith.constant 0 : i32
    %c0_i32_0 = arith.constant 0 : i32
    return %arg0, %arg1, %c0_i32 : i32, i32, i32
  }
  func.func @transform_2(%arg0: i32, %arg1: i32) -> (i32, i32) {
    %c0_i32 = arith.constant 0 : i32
    %c0_i32_0 = arith.constant 0 : i32
    %c0_i32_1 = arith.constant 0 : i32
    return %c0_i32, %c0_i32_0 : i32, i32
  }
  func.func @transform_3(%arg0: i32, %arg1: i32) -> (i32, i32) {
    %c0_i32 = arith.constant 0 : i32
    %c0_i32_0 = arith.constant 0 : i32
    %c0_i32_1 = arith.constant 0 : i32
    return %c0_i32, %c0_i32_0 : i32, i32
  }
  func.func @transform_4(%arg0: i32, %arg1: i32) -> (i32, i32) {
    %c0_i32 = arith.constant 0 : i32
    %c0_i32_0 = arith.constant 0 : i32
    %c0_i32_1 = arith.constant 0 : i32
    return %c0_i32, %c0_i32_0 : i32, i32
  }
  func.func @transform_5(%arg0: i32, %arg1: i32) -> (i32, i32, i32) {
    %c0_i32 = arith.constant 0 : i32
    %c0_i32_0 = arith.constant 0 : i32
    return %arg0, %arg1, %c0_i32 : i32, i32, i32
  }
  func.func @transform_6(%arg0: i32, %arg1: i32) -> (i32, i32, i32) {
    %c0_i32 = arith.constant 0 : i32
    %c0_i32_0 = arith.constant 0 : i32
    return %arg0, %arg1, %c0_i32 : i32, i32, i32
  }
}

</mosaic_0001>

<llo_original>
// kernel: tpu_custom_call.1
$region0: #{tpu_custom_call.1}
  #allocation0 [shape = 'u32[]', space=smem, size = 0x4, offset = 0x4, fixed_abs, tag = 'smem constant byte address 0x4 - core index']
  #allocation1 [shape = 'u32[144,128]{1,0:T(1,128)}', space=vmem, size = 0x12000, scoped, tag = 'internal scratch']
  %s0 = inlined_call_operand.hbm [shape: f32[2,8,32], index: 0, kind: input, shape index: {}]
  %s1 = inlined_call_operand.hbm [shape: f32[2,8,32], index: 1, kind: input, shape index: {}]
  %s2 = inlined_call_operand.hbm [shape: f32[32,32], index: 2, kind: input, shape index: {}]
  %s3 = inlined_call_operand.hbm [shape: f32[32,32], index: 3, kind: input, shape index: {}]
  %s4 = inlined_call_operand.vmem [shape: f32[1,32], index: 4, kind: input, shape index: {}]
  %s5 = inlined_call_operand.hbm [shape: f32[2,8,32], index: 5, kind: output, shape index: {0}]
  %s6 = inlined_call_operand.hbm [shape: f32[2,8,8], index: 6, kind: output, shape index: {1}]
  %7 = xla_tuple %s5, %s6
  %s8 = sld [smem:[#allocation0]]
  $region77: #{tpu_custom_call.1} parent=0
    _
  %s10 = ssub.s32 1, %s8
  %s11 = scalar_select 0, %s10, %s8
  $region1: #{tpu_custom_call.1} parent=0
    #allocation2 [shape = 'u8[8192]{0}', space=vmem, size = 0x2000, scoped, tag = 'input window, operand 0']
    #allocation3 [shape = 's32[2]{0}', space=sflag, size = 0x8, scoped, tag = 'scoped memory for tpu_custom_call.1']
    #allocation4 [shape = 's32[2]{0}', space=sflag, size = 0x8, scoped, tag = 'scoped memory for tpu_custom_call.1']
    #allocation5 [shape = 'u8[8192]{0}', space=vmem, size = 0x2000, scoped, tag = 'input window, operand 1']
    #allocation6 [shape = 's32[2]{0}', space=sflag, size = 0x8, scoped, tag = 'scoped memory for tpu_custom_call.1']
    #allocation7 [shape = 'u8[16384]{0}', space=vmem, size = 0x4000, scoped, tag = 'input window, operand 2, single buffered']
    #allocation8 [shape = 'u8[16384]{0}', space=vmem, size = 0x4000, scoped, tag = 'input window, operand 3, single buffered']
    #allocation9 [shape = 's32[1]{0}', space=sflag, size = 0x4, scoped, tag = 'scoped memory for tpu_custom_call.1']
    #allocation10 [shape = 'u8[8192]{0}', space=vmem, size = 0x2000, scoped, tag = 'output window, operand 0']
    #allocation11 [shape = 'u8[8192]{0}', space=vmem, size = 0x2000, scoped, tag = 'output window, operand 1']
    #allocation12 [shape = 's32[2]{0}', space=sflag, size = 0x8, scoped, tag = 'scoped memory for tpu_custom_call.1']
    %12 = vsyncpa [#allocation3], 0
    %s13 = scalar_lea.sflag [#allocation3], 1
    %14 = vsyncpa %s13, 0
    %15 = vsyncpa [#allocation6], 0
    %s16 = scalar_lea.sflag [#allocation6], 1
    %17 = vsyncpa %s16, 0
    %18 = vsyncpa [#allocation9], 0
    %19 = vsyncpa [#allocation4], 0
    %s20 = scalar_lea.sflag [#allocation4], 1
    %21 = vsyncpa %s20, 0
    %22 = vsyncpa [#allocation12], 0
    %s23 = scalar_lea.sflag [#allocation12], 1
    %24 = vsyncpa %s23, 0
    loop: start=0, step=1, limit=4
    $region2: #{tpu_custom_call.1} parent=1 // loop_pre_header
      _
    $region3: #{tpu_custom_call.1} parent=1 // loop_header
      %s26 = sphi 0, %s30
      %p27 = scmp.ge.s32.totalorder %s26, 4
      %s33 = sphi 0, %s45
      %s34 = sphi 0, %s41
      %s35 = sphi 0, %s33
      %s36 = sphi 0, %s34
      %s37 = sphi 0, %s35
      %s38 = sphi 0, %s36
      %s48 = sphi 0, %s50
      %s51 = sphi 0, %s48
      %s52 = sphi 0, %s51
      %s68 = sphi 0, %s52
      %s76 = sphi 0, %s78
      %s79 = sphi 0, %s76
      %s80 = sphi 0, %s79
      %s96 = sphi 0, %s80
      %s100 = sphi 0, %s100
      %s102 = sphi 0, %s100
      %s103 = sphi 0, %s102
      %s117 = sphi 0, %s103
      %s121 = sphi 0, %s121
      %s123 = sphi 0, %s121
      %s124 = sphi 0, %s123
      %s138 = sphi 0, %s124
      %s142 = sphi 0, %s142
      %s144 = sphi 0, %s142
      %s145 = sphi 0, %s144
      %s159 = sphi 0, %s145
      %s167 = sphi 0, %s169
      %s170 = sphi 0, %s167
      %s171 = sphi 0, %s170
      %s187 = sphi 0, %s171
      %s195 = sphi 0, %s197
      %s198 = sphi 0, %s195
      %s199 = sphi 0, %s198
      %s215 = sphi 0, %s199
    $region4: #{tpu_custom_call.1} parent=1 // loop_header_branch
      %29 = sbr.rel (%p27) target = $region8
    $region5: #{tpu_custom_call.1} parent=1 // loop_body
      %s31 = ssub.s32 %s26, 1
      %s32 = ssub.s32 %s26, 2
      %s39 = sadd.s32 1, %s34
      %p40 = scmp.ge.s32.totalorder %s39, 1
      %s41 = scalar_select %p40, 0, %s39
      %s42 = sadd.s32 1, %s33
      %s43 = scalar_select %p40, %s42, %s33
      %p44 = scmp.ge.s32.totalorder %s43, 2
      %s45 = scalar_select %p44, 0, %s43
      %s46 = ssub.s32 %s33, %s45
      %p47 = scmp.eq.s32.totalorder %s46, 0
      %s49 = sadd.s32 %s48, 1
      %s50 = scalar_select %p47, %s48, %s49
      %p53 = pneg %p47
      %p54 = scmp.eq.s32.totalorder %s26, 1
      %p55 = por %p53, %p54
      %p56 = scmp.ne.s32.totalorder %s48, %s51
      %p57 = scmp.eq.s32.totalorder %s26, 0
      %p58 = por %p56, %p57
      %p59 = scmp.ne.s32.totalorder %s48, %s51
      %p60 = scmp.eq.s32.totalorder %s31, 1
      %p61 = por %p59, %p60
      %p62 = scmp.ne.s32.totalorder %s51, %s52
      %p63 = scmp.eq.s32.totalorder %s31, 0
      %p64 = por %p62, %p63
      %p65 = scmp.ne.s32.totalorder %s51, %s52
      %p66 = scmp.eq.s32.totalorder %s32, 1
      %p67 = por %p65, %p66
      %p69 = scmp.ne.s32.totalorder %s52, %s68
      %p70 = scmp.eq.s32.totalorder %s32, 0
      %p71 = por %p69, %p70
      %s72 = ssub.s32 %s33, %s45
      %s73 = ssub.s32 %s34, %s41
      %s74 = sor.u32 %s72, %s73
      %p75 = scmp.eq.s32.totalorder %s74, 0
      %s77 = sadd.s32 %s76, 1
      %s78 = scalar_select %p75, %s76, %s77
      %p81 = pneg %p75
      %p82 = scmp.eq.s32.totalorder %s26, 1
      %p83 = por %p81, %p82
      %p84 = scmp.ne.s32.totalorder %s76, %s79
      %p85 = scmp.eq.s32.totalorder %s26, 0
      %p86 = por %p84, %p85
      %p87 = scmp.ne.s32.totalorder %s76, %s79
      %p88 = scmp.eq.s32.totalorder %s31, 1
      %p89 = por %p87, %p88
      %p90 = scmp.ne.s32.totalorder %s79, %s80
      %p91 = scmp.eq.s32.totalorder %s31, 0
      %p92 = por %p90, %p91
      %p93 = scmp.ne.s32.totalorder %s79, %s80
      %p94 = scmp.eq.s32.totalorder %s32, 1
      %p95 = por %p93, %p94
      %p97 = scmp.ne.s32.totalorder %s80, %s96
      %p98 = scmp.eq.s32.totalorder %s32, 0
      %p99 = por %p97, %p98
      %s101 = sadd.s32 %s100, 1
      %p104 = scmp.eq.s32.totalorder %s26, 1
      %p105 = scmp.ne.s32.totalorder %s100, %s102
      %p106 = scmp.eq.s32.totalorder %s26, 0
      %p107 = por %p105, %p106
      %p108 = scmp.ne.s32.totalorder %s100, %s102
      %p109 = scmp.eq.s32.totalorder %s31, 1
      %p110 = por %p108, %p109
      %p111 = scmp.ne.s32.totalorder %s102, %s103
      %p112 = scmp.eq.s32.totalorder %s31, 0
      %p113 = por %p111, %p112
      %p114 = scmp.ne.s32.totalorder %s102, %s103
      %p115 = scmp.eq.s32.totalorder %s32, 1
      %p116 = por %p114, %p115
      %p118 = scmp.ne.s32.totalorder %s103, %s117
      %p119 = scmp.eq.s32.totalorder %s32, 0
      %p120 = por %p118, %p119
      %s122 = sadd.s32 %s121, 1
      %p125 = scmp.eq.s32.totalorder %s26, 1
      %p126 = scmp.ne.s32.totalorder %s121, %s123
      %p127 = scmp.eq.s32.totalorder %s26, 0
      %p128 = por %p126, %p127
      %p129 = scmp.ne.s32.totalorder %s121, %s123
      %p130 = scmp.eq.s32.totalorder %s31, 1
      %p131 = por %p129, %p130
      %p132 = scmp.ne.s32.totalorder %s123, %s124
      %p133 = scmp.eq.s32.totalorder %s31, 0
      %p134 = por %p132, %p133
      %p135 = scmp.ne.s32.totalorder %s123, %s124
      %p136 = scmp.eq.s32.totalorder %s32, 1
      %p137 = por %p135, %p136
      %p139 = scmp.ne.s32.totalorder %s124, %s138
      %p140 = scmp.eq.s32.totalorder %s32, 0
      %p141 = por %p139, %p140
      %s143 = sadd.s32 %s142, 1
      %p146 = scmp.eq.s32.totalorder %s26, 1
      %p147 = scmp.ne.s32.totalorder %s142, %s144
      %p148 = scmp.eq.s32.totalorder %s26, 0
      %p149 = por %p147, %p148
      %p150 = scmp.ne.s32.totalorder %s142, %s144
      %p151 = scmp.eq.s32.totalorder %s31, 1
      %p152 = por %p150, %p151
      %p153 = scmp.ne.s32.totalorder %s144, %s145
      %p154 = scmp.eq.s32.totalorder %s31, 0
      %p155 = por %p153, %p154
      %p156 = scmp.ne.s32.totalorder %s144, %s145
      %p157 = scmp.eq.s32.totalorder %s32, 1
      %p158 = por %p156, %p157
      %p160 = scmp.ne.s32.totalorder %s145, %s159
      %p161 = scmp.eq.s32.totalorder %s32, 0
      %p162 = por %p160, %p161
      %s163 = ssub.s32 %s33, %s45
      %s164 = ssub.s32 %s34, %s41
      %s165 = sor.u32 %s163, %s164
      %p166 = scmp.eq.s32.totalorder %s165, 0
      %s168 = sadd.s32 %s167, 1
      %s169 = scalar_select %p166, %s167, %s168
      %p172 = pneg %p166
      %p173 = scmp.eq.s32.totalorder %s26, 1
      %p174 = por %p172, %p173
      %p175 = scmp.ne.s32.totalorder %s167, %s170
      %p176 = scmp.eq.s32.totalorder %s26, 0
      %p177 = por %p175, %p176
      %p178 = scmp.ne.s32.totalorder %s167, %s170
      %p179 = scmp.eq.s32.totalorder %s31, 1
      %p180 = por %p178, %p179
      %p181 = scmp.ne.s32.totalorder %s170, %s171
      %p182 = scmp.eq.s32.totalorder %s31, 0
      %p183 = por %p181, %p182
      %p184 = scmp.ne.s32.totalorder %s170, %s171
      %p185 = scmp.eq.s32.totalorder %s32, 1
      %p186 = por %p184, %p185
      %p188 = scmp.ne.s32.totalorder %s171, %s187
      %p189 = scmp.eq.s32.totalorder %s32, 0
      %p190 = por %p188, %p189
      %s191 = ssub.s32 %s33, %s45
      %s192 = ssub.s32 %s34, %s41
      %s193 = sor.u32 %s191, %s192
      %p194 = scmp.eq.s32.totalorder %s193, 0
      %s196 = sadd.s32 %s195, 1
      %s197 = scalar_select %p194, %s195, %s196
      %p200 = pneg %p194
      %p201 = scmp.eq.s32.totalorder %s26, 1
      %p202 = por %p200, %p201
      %p203 = scmp.ne.s32.totalorder %s195, %s198
      %p204 = scmp.eq.s32.totalorder %s26, 0
      %p205 = por %p203, %p204
      %p206 = scmp.ne.s32.totalorder %s195, %s198
      %p207 = scmp.eq.s32.totalorder %s31, 1
      %p208 = por %p206, %p207
      %p209 = scmp.ne.s32.totalorder %s198, %s199
      %p210 = scmp.eq.s32.totalorder %s31, 0
      %p211 = por %p209, %p210
      %p212 = scmp.ne.s32.totalorder %s198, %s199
      %p213 = scmp.eq.s32.totalorder %s32, 1
      %p214 = por %p212, %p213
      %p216 = scmp.ne.s32.totalorder %s199, %s215
      %p217 = scmp.eq.s32.totalorder %s32, 0
      %p218 = por %p216, %p217
      %p219 = scmp.le.s32.totalorder 1, %s26
      %p220 = scmp.lt.s32.totalorder %s26, 3
      %p221 = pnand %p219, %p220
      %p222 = pneg %p221
      // Predicated region
      $region9: #{tpu_custom_call.1} parent=5 // pred_check
        _
      $region10: #{tpu_custom_call.1} parent=5 // pred_check_branch
        %224 = sbr.rel (%p221) target = $region12
      $region11: #{tpu_custom_call.1} parent=5 // pred_region
        %s225 = ssub.s32 %s26, 1
        // Predicated region
        $region13: #{tpu_custom_call.1} parent=11 // pred_check
          %p226 = pneg %p113
        $region14: #{tpu_custom_call.1} parent=11 // pred_check_branch
          %228 = sbr.rel (%p226) target = $region16
        $region15: #{tpu_custom_call.1} parent=11 // pred_region
          %s230 = ssub.s32 512, 512
          %231 = vsyncadd [#allocation6], %s230
          %s232 = sshll.u32 [#allocation7], 4
          %s233 = int_to_ptr.vmem [resolvable:$true] %s232
          %238 = dma.hbm_to_vmem [thread:$0]  %s2, 512, %s233, [#allocation6], 128, 128, 8
        $region16: #{tpu_custom_call.1} parent=11 // pred_fallthru
          _
        // Predicated region
        $region17: #{tpu_custom_call.1} parent=11 // pred_check
          %p239 = pneg %p134
        $region18: #{tpu_custom_call.1} parent=11 // pred_check_branch
          %241 = sbr.rel (%p239) target = $region20
        $region19: #{tpu_custom_call.1} parent=11 // pred_region
          %s243 = ssub.s32 512, 512
          %244 = vsyncadd [#allocation9], %s243
          %s245 = sshll.u32 [#allocation8], 4
          %s246 = int_to_ptr.vmem [resolvable:$true] %s245
          %251 = dma.hbm_to_vmem [thread:$0]  %s3, 512, %s246, [#allocation9], 128, 128, 8
        $region20: #{tpu_custom_call.1} parent=11 // pred_fallthru
          _
        // Predicated region
        $region21: #{tpu_custom_call.1} parent=11 // pred_check
          %p252 = pneg %p155
        $region22: #{tpu_custom_call.1} parent=11 // pred_check_branch
          %254 = sbr.rel (%p252) target = $region24
        $region23: #{tpu_custom_call.1} parent=11 // pred_region
          _
        $region24: #{tpu_custom_call.1} parent=11 // pred_fallthru
          _
      $region12: #{tpu_custom_call.1} parent=5 // pred_fallthru
        _
      %p255 = scmp.lt.s32.totalorder %s26, 2
      // Predicated region
      $region25: #{tpu_custom_call.1} parent=5 // pred_check
        %p256 = pneg %p255
      $region26: #{tpu_custom_call.1} parent=5 // pred_check_branch
        %258 = sbr.rel (%p256) target = $region28
      $region27: #{tpu_custom_call.1} parent=5 // pred_region
        // Predicated region
        $region29: #{tpu_custom_call.1} parent=27 // pred_check
          %p259 = pneg %p58
        $region30: #{tpu_custom_call.1} parent=27 // pred_check_branch
          %261 = sbr.rel (%p259) target = $region32
        $region31: #{tpu_custom_call.1} parent=27 // pred_region
          %s262 = sand.u32 %s48, 1
          %s263 = scalar_lea.sflag [#allocation3], %s262
          %s264 = sand.u32 %s48, 1
          %s265 = smul.addr %s264, 8
          %s266 = scalar_lea.vmem [#allocation2], %s265
          %s268 = ssub.s32 128, 128
          %269 = vsyncadd %s263, %s268
          %s270 = smul.addr %s33, 128
          %s271 = scalar_lea.hbm %s0, %s270
          %s273 = sshll.u32 %s266, 4
          %s274 = int_to_ptr.vmem [resolvable:$true] %s273
          %276 = dma.hbm_to_vmem [thread:$0]  %s271, 128, %s274, %s263
        $region32: #{tpu_custom_call.1} parent=27 // pred_fallthru
          _
        // Predicated region
        $region33: #{tpu_custom_call.1} parent=27 // pred_check
          %p277 = pneg %p86
        $region34: #{tpu_custom_call.1} parent=27 // pred_check_branch
          %279 = sbr.rel (%p277) target = $region36
        $region35: #{tpu_custom_call.1} parent=27 // pred_region
          %s280 = sand.u32 %s26, 1
          %s281 = scalar_lea.sflag [#allocation6], %s280
          %s282 = sand.u32 %s76, 1
          %s283 = smul.addr %s282, 8
          %s284 = scalar_lea.vmem [#allocation5], %s283
          %s286 = ssub.s32 128, 128
          %287 = vsyncadd %s281, %s286
          %s288 = sadd.s32 %s34, %s33
          %s289 = smul.addr %s288, 128
          %s290 = scalar_lea.hbm %s1, %s289
          %s292 = sshll.u32 %s284, 4
          %s293 = int_to_ptr.vmem [resolvable:$true] %s292
          %295 = dma.hbm_to_vmem [thread:$0]  %s290, 128, %s293, %s281
        $region36: #{tpu_custom_call.1} parent=27 // pred_fallthru
          _
      $region28: #{tpu_custom_call.1} parent=5 // pred_fallthru
        _
      %p296 = scmp.le.s32.totalorder 1, %s26
      %p297 = scmp.lt.s32.totalorder %s26, 3
      %p298 = pnand %p296, %p297
      %p299 = pneg %p298
      // Predicated region
      $region37: #{tpu_custom_call.1} parent=5 // pred_check
        _
      $region38: #{tpu_custom_call.1} parent=5 // pred_check_branch
        %301 = sbr.rel (%p298) target = $region40
      $region39: #{tpu_custom_call.1} parent=5 // pred_region
        %s302 = ssub.s32 %s26, 1
        %s303 = sand.u32 %s51, 1
        %s304 = scalar_lea.sflag [#allocation3], %s303
        %s305 = sand.u32 %s51, 1
        %s306 = smul.addr %s305, 8
        %s307 = scalar_lea.vmem [#allocation2], %s306
        // Predicated region
        $region41: #{tpu_custom_call.1} parent=39 // pred_check
          %p308 = pneg %p64
        $region42: #{tpu_custom_call.1} parent=39 // pred_check_branch
          %310 = sbr.rel (%p308) target = $region44
        $region43: #{tpu_custom_call.1} parent=39 // pred_region
          %311 = dma.done %s304, 128
        $region44: #{tpu_custom_call.1} parent=39 // pred_fallthru
          _
        %s312 = sand.u32 %s31, 1
        %s313 = scalar_lea.sflag [#allocation6], %s312
        %s314 = sand.u32 %s79, 1
        %s315 = smul.addr %s314, 8
        %s316 = scalar_lea.vmem [#allocation5], %s315
        // Predicated region
        $region45: #{tpu_custom_call.1} parent=39 // pred_check
          %p317 = pneg %p92
        $region46: #{tpu_custom_call.1} parent=39 // pred_check_branch
          %319 = sbr.rel (%p317) target = $region48
        $region47: #{tpu_custom_call.1} parent=39 // pred_region
          %320 = dma.done %s313, 128
        $region48: #{tpu_custom_call.1} parent=39 // pred_fallthru
          _
        // Predicated region
        $region49: #{tpu_custom_call.1} parent=39 // pred_check
          %p321 = pneg %p113
        $region50: #{tpu_custom_call.1} parent=39 // pred_check_branch
          %323 = sbr.rel (%p321) target = $region52
        $region51: #{tpu_custom_call.1} parent=39 // pred_region
          %324 = dma.done [#allocation6], 512
        $region52: #{tpu_custom_call.1} parent=39 // pred_fallthru
          _
        // Predicated region
        $region53: #{tpu_custom_call.1} parent=39 // pred_check
          %p325 = pneg %p134
        $region54: #{tpu_custom_call.1} parent=39 // pred_check_branch
          %327 = sbr.rel (%p325) target = $region56
        $region55: #{tpu_custom_call.1} parent=39 // pred_region
          %328 = dma.done [#allocation9], 512
        $region56: #{tpu_custom_call.1} parent=39 // pred_fallthru
          _
        %s329 = sand.u32 %s51, 1
        %s330 = scalar_lea.sflag [#allocation3], %s329
        %s331 = sand.u32 %s51, 1
        %s332 = smul.addr %s331, 8
        %s333 = scalar_lea.vmem [#allocation2], %s332
        %p334 = pneg %p64
        %p335 = pneg %p61
        %s336 = sand.u32 %s31, 1
        %s337 = scalar_lea.sflag [#allocation6], %s336
        %s338 = sand.u32 %s79, 1
        %s339 = smul.addr %s338, 8
        %s340 = scalar_lea.vmem [#allocation5], %s339
        %p341 = pneg %p92
        %p342 = pneg %p89
        %p343 = pneg %p113
        %p344 = pneg %p110
        %p345 = pneg %p134
        %p346 = pneg %p131
        %p347 = pneg %p155
        %p348 = pneg %p152
        %p349 = pneg %p183
        %p350 = pneg %p180
        %s351 = sand.u32 %s170, 1
        %s352 = scalar_lea.sflag [#allocation4], %s351
        %s353 = sand.u32 %s170, 1
        %s354 = smul.addr %s353, 8
        %s355 = scalar_lea.vmem [#allocation10], %s354
        %p356 = pneg %p211
        %p357 = pneg %p208
        %s358 = sand.u32 %s198, 1
        %s359 = scalar_lea.sflag [#allocation12], %s358
        %s360 = sand.u32 %s198, 1
        %s361 = smul.addr %s360, 8
        %s362 = scalar_lea.vmem [#allocation11], %s361
        %v363 = vld [vmem:[%s307] sm:$0xff]
        %v364 = vld [vmem:[%s316] sm:$0xff]
        %vm365 = vcmask 261120
        %v367 = vsel %vm365, %v364, 0
        %v370 = vsel %vm365, %v363, 0
        %372 = vmatprep.subr.mxu0 0.0
        %373 = vmatpush1.xpose.msra.mxu0 %v370
        %374 = vmatprep.subr.mxu0 0.0
        %375 = vmatpush1.xpose.msra.mxu0 0.0
        %376 = vmatprep.subr.mxu0 0.0
        %377 = vmatpush1.xpose.msra.mxu0 0.0
        %378 = vmatprep.subr.mxu0 0.0
        %379 = vmatpush1.xpose.msra.mxu0 0.0
        %380 = vmatprep.subr.mxu0 0.0
        %381 = vmatpush1.xpose.msra.mxu0 0.0
        %382 = vmatprep.subr.mxu0 0.0
        %383 = vmatpush1.xpose.msra.mxu0 0.0
        %384 = vmatprep.subr.mxu0 0.0
        %385 = vmatpush1.xpose.msra.mxu0 0.0
        %386 = vmatprep.subr.mxu0 0.0
        %387 = vmatpush1.xpose.msra.mxu0 0.0
        %388 = vmatprep.subr.mxu0 0.0
        %389 = vmatpush1.xpose.msra.mxu0 0.0
        %390 = vmatprep.subr.mxu0 0.0
        %391 = vmatpush1.xpose.msra.mxu0 0.0
        %392 = vmatprep.subr.mxu0 0.0
        %393 = vmatpush1.xpose.msra.mxu0 0.0
        %394 = vmatprep.subr.mxu0 0.0
        %395 = vmatpush1.xpose.msra.mxu0 0.0
        %396 = vmatprep.subr.mxu0 0.0
        %397 = vmatpush1.xpose.msra.mxu0 0.0
        %398 = vmatprep.subr.mxu0 0.0
        %399 = vmatpush1.xpose.msra.mxu0 0.0
        %400 = vmatprep.subr.mxu0 0.0
        %401 = vmatpush1.xpose.msra.mxu0 0.0
        %402 = vmatprep.subr.mxu0 0.0
        %403 = vmatpush1.xpose.msra.mxu0 0.0
        %404 = vmatprep.subr.mxu0 0.0
        %405 = vmatpush1.xpose.msra.mxu0 0.0
        %406 = vmatprep.subr.mxu0 0.0
        %407 = vmatpush1.xpose.msra.mxu0 0.0
        %408 = vmatprep.subr.mxu0 0.0
        %409 = vmatpush1.xpose.msra.mxu0 0.0
        %410 = vmatprep.subr.mxu0 0.0
        %411 = vmatpush1.xpose.msra.mxu0 0.0
        %412 = vmatprep.subr.mxu0 0.0
        %413 = vmatpush1.xpose.msra.mxu0 0.0
        %414 = vmatprep.subr.mxu0 0.0
        %415 = vmatpush1.xpose.msra.mxu0 0.0
        %416 = vmatprep.subr.mxu0 0.0
        %417 = vmatpush1.xpose.msra.mxu0 0.0
        %418 = vmatprep.subr.mxu0 0.0
        %419 = vmatpush1.xpose.msra.mxu0 0.0
        %420 = vmatprep.subr.mxu0 0.0
        %421 = vmatpush1.xpose.msra.mxu0 0.0
        %422 = vmatprep.subr.mxu0 0.0
        %423 = vmatpush1.xpose.msra.mxu0 0.0
        %424 = vmatprep.subr.mxu0 0.0
        %425 = vmatpush1.xpose.msra.mxu0 0.0
        %426 = vmatprep.subr.mxu0 0.0
        %427 = vmatpush1.xpose.msra.mxu0 0.0
        %428 = vmatprep.subr.mxu0 0.0
        %429 = vmatpush1.xpose.msra.mxu0 0.0
        %430 = vmatprep.subr.mxu0 0.0
        %431 = vmatpush1.xpose.msra.mxu0 0.0
        %432 = vmatprep.subr.mxu0 0.0
        %433 = vmatpush1.xpose.msra.mxu0 0.0
        %434 = vmatprep.subr.mxu0 0.0
        %435 = vmatpush1.xpose.msra.mxu0 0.0
        %436 = vmatprep.mubr.f32.mxu0 0.0
        %437 = vmatmul.mubr.f32.gmra.mrb[0].mxu0 %v367
        %v438 = vpop.f32.mrb[0].mxu0
        %v439 = vadd.f32 0.0, %v438
        %v440 = vpop.f32.mrb[0].mxu0
        %441 = vdwg.mxu0
        %vm442 = vcmask 64512
        %v443 = vsel %vm442, %v439, -inf
        %444 = vmax.xlane.f32.xlu0 %v443
        %v445 = vpop.xlane.xlu0 %444
        %v446 = vsub.f32 %v439, %v445
        %v447 = vmul.f32 %v446, 1.442695
        %v448 = vpow.pop %v447
        %v449 = vsel %vm442, %v448, 0.0
        %450 = vadd.xlane.f32.xlu0 %v449
        %v451 = vpop.xlane.xlu0 %450
        %v452 = vrcp.pop %v451
        %v453 = vmul.f32 %v448, %v452
        %v455 = vsel %vm442, %v453, 0
        %457 = vmatprep.subr.mxu0 0.0
        %458 = vmatpush1.msra.mxu0 %v363
        %459 = vmatprep.subr.mxu0 0.0
        %460 = vmatpush1.msra.mxu0 0.0
        %461 = vmatprep.subr.mxu0 0.0
        %462 = vmatpush1.msra.mxu0 0.0
        %463 = vmatprep.subr.mxu0 0.0
        %464 = vmatpush1.msra.mxu0 0.0
        %465 = vmatprep.subr.mxu0 0.0
        %466 = vmatpush1.msra.mxu0 0.0
        %467 = vmatprep.subr.mxu0 0.0
        %468 = vmatpush1.msra.mxu0 0.0
        %469 = vmatprep.subr.mxu0 0.0
        %470 = vmatpush1.msra.mxu0 0.0
        %471 = vmatprep.subr.mxu0 0.0
        %472 = vmatpush1.msra.mxu0 0.0
        %473 = vmatprep.subr.mxu0 0.0
        %474 = vmatpush1.msra.mxu0 0.0
        %475 = vmatprep.subr.mxu0 0.0
        %476 = vmatpush1.msra.mxu0 0.0
        %477 = vmatprep.subr.mxu0 0.0
        %478 = vmatpush1.msra.mxu0 0.0
        %479 = vmatprep.subr.mxu0 0.0
        %480 = vmatpush1.msra.mxu0 0.0
        %481 = vmatprep.subr.mxu0 0.0
        %482 = vmatpush1.msra.mxu0 0.0
        %483 = vmatprep.subr.mxu0 0.0
        %484 = vmatpush1.msra.mxu0 0.0
        %485 = vmatprep.subr.mxu0 0.0
        %486 = vmatpush1.msra.mxu0 0.0
        %487 = vmatprep.subr.mxu0 0.0
        %488 = vmatpush1.msra.mxu0 0.0
        %489 = vmatprep.subr.mxu0 0.0
        %490 = vmatpush1.msra.mxu0 0.0
        %491 = vmatprep.subr.mxu0 0.0
        %492 = vmatpush1.msra.mxu0 0.0
        %493 = vmatprep.subr.mxu0 0.0
        %494 = vmatpush1.msra.mxu0 0.0
        %495 = vmatprep.subr.mxu0 0.0
        %496 = vmatpush1.msra.mxu0 0.0
        %497 = vmatprep.subr.mxu0 0.0
        %498 = vmatpush1.msra.mxu0 0.0
        %499 = vmatprep.subr.mxu0 0.0
        %500 = vmatpush1.msra.mxu0 0.0
        %501 = vmatprep.subr.mxu0 0.0
        %502 = vmatpush1.msra.mxu0 0.0
        %503 = vmatprep.subr.mxu0 0.0
        %504 = vmatpush1.msra.mxu0 0.0
        %505 = vmatprep.subr.mxu0 0.0
        %506 = vmatpush1.msra.mxu0 0.0
        %507 = vmatprep.subr.mxu0 0.0
        %508 = vmatpush1.msra.mxu0 0.0
        %509 = vmatprep.subr.mxu0 0.0
        %510 = vmatpush1.msra.mxu0 0.0
        %511 = vmatprep.subr.mxu0 0.0
        %512 = vmatpush1.msra.mxu0 0.0
        %513 = vmatprep.subr.mxu0 0.0
        %514 = vmatpush1.msra.mxu0 0.0
        %515 = vmatprep.subr.mxu0 0.0
        %516 = vmatpush1.msra.mxu0 0.0
        %517 = vmatprep.subr.mxu0 0.0
        %518 = vmatpush1.msra.mxu0 0.0
        %519 = vmatprep.subr.mxu0 0.0
        %520 = vmatpush1.msra.mxu0 0.0
        %521 = vmatprep.mubr.f32.mxu0 0.0
        %522 = vmatmul.mubr.f32.gmra.mrb[0].mxu0 %v455
        %v523 = vpop.f32.mrb[0].mxu0
        %v524 = vadd.f32 0.0, %v523
        %v525 = vpop.f32.mrb[0].mxu0
        %526 = vdwg.mxu0
        %v527 = vld [vmem:[#allocation7] sm:$0xff]
        %v528 = vld [vmem:[#allocation7 + $0x8] sm:$0xff]
        %v529 = vld [vmem:[#allocation7 + $0x10] sm:$0xff]
        %v530 = vld [vmem:[#allocation7 + $0x18] sm:$0xff]
        %v531 = vld [vmem:[#allocation8] sm:$0xff]
        %v532 = vld [vmem:[#allocation8 + $0x8] sm:$0xff]
        %v533 = vld [vmem:[#allocation8 + $0x10] sm:$0xff]
        %v534 = vld [vmem:[#allocation8 + $0x18] sm:$0xff]
        %535 = vmatprep.subr.mxu0 0.0
        %536 = vmatpush1.msra.mxu0 %v531
        %537 = vmatprep.subr.mxu0 0.0
        %538 = vmatpush1.msra.mxu0 %v532
        %539 = vmatprep.subr.mxu0 0.0
        %540 = vmatpush1.msra.mxu0 %v533
        %541 = vmatprep.subr.mxu0 0.0
        %542 = vmatpush1.msra.mxu0 %v534
        %543 = vmatprep.subr.mxu0 0.0
        %544 = vmatpush1.msra.mxu0 0.0
        %545 = vmatprep.subr.mxu0 0.0
        %546 = vmatpush1.msra.mxu0 0.0
        %547 = vmatprep.subr.mxu0 0.0
        %548 = vmatpush1.msra.mxu0 0.0
        %549 = vmatprep.subr.mxu0 0.0
        %550 = vmatpush1.msra.mxu0 0.0
        %551 = vmatprep.subr.mxu0 0.0
        %552 = vmatpush1.msra.mxu0 0.0
        %553 = vmatprep.subr.mxu0 0.0
        %554 = vmatpush1.msra.mxu0 0.0
        %555 = vmatprep.subr.mxu0 0.0
        %556 = vmatpush1.msra.mxu0 0.0
        %557 = vmatprep.subr.mxu0 0.0
        %558 = vmatpush1.msra.mxu0 0.0
        %559 = vmatprep.subr.mxu0 0.0
        %560 = vmatpush1.msra.mxu0 0.0
        %561 = vmatprep.subr.mxu0 0.0
        %562 = vmatpush1.msra.mxu0 0.0
        %563 = vmatprep.subr.mxu0 0.0
        %564 = vmatpush1.msra.mxu0 0.0
        %565 = vmatprep.subr.mxu0 0.0
        %566 = vmatpush1.msra.mxu0 0.0
        %567 = vmatprep.subr.mxu0 0.0
        %568 = vmatpush1.msra.mxu0 0.0
        %569 = vmatprep.subr.mxu0 0.0
        %570 = vmatpush1.msra.mxu0 0.0
        %571 = vmatprep.subr.mxu0 0.0
        %572 = vmatpush1.msra.mxu0 0.0
        %573 = vmatprep.subr.mxu0 0.0
        %574 = vmatpush1.msra.mxu0 0.0
        %575 = vmatprep.subr.mxu0 0.0
        %576 = vmatpush1.msra.mxu0 0.0
        %577 = vmatprep.subr.mxu0 0.0
        %578 = vmatpush1.msra.mxu0 0.0
        %579 = vmatprep.subr.mxu0 0.0
        %580 = vmatpush1.msra.mxu0 0.0
        %581 = vmatprep.subr.mxu0 0.0
        %582 = vmatpush1.msra.mxu0 0.0
        %583 = vmatprep.subr.mxu0 0.0
        %584 = vmatpush1.msra.mxu0 0.0
        %585 = vmatprep.subr.mxu0 0.0
        %586 = vmatpush1.msra.mxu0 0.0
        %587 = vmatprep.subr.mxu0 0.0
        %588 = vmatpush1.msra.mxu0 0.0
        %589 = vmatprep.subr.mxu0 0.0
        %590 = vmatpush1.msra.mxu0 0.0
        %591 = vmatprep.subr.mxu0 0.0
        %592 = vmatpush1.msra.mxu0 0.0
        %593 = vmatprep.subr.mxu0 0.0
        %594 = vmatpush1.msra.mxu0 0.0
        %595 = vmatprep.subr.mxu0 0.0
        %596 = vmatpush1.msra.mxu0 0.0
        %597 = vmatprep.subr.mxu0 0.0
        %598 = vmatpush1.msra.mxu0 0.0
        %599 = vmatprep.mubr.f32.mxu0 0.0
        %600 = vmatmul.mubr.f32.gmra.mrb[0].mxu0 %v367
        %v601 = vpop.f32.mrb[0].mxu0
        %v602 = vadd.f32 0.0, %v601
        %v603 = vpop.f32.mrb[0].mxu0
        %604 = vdwg.mxu0
        %v606 = vsel %vm365, %v524, 0
        %608 = vmatprep.subr.mxu0 0.0
        %609 = vmatpush1.msra.mxu0 %v527
        %610 = vmatprep.subr.mxu0 0.0
        %611 = vmatpush1.msra.mxu0 %v528
        %612 = vmatprep.subr.mxu0 0.0
        %613 = vmatpush1.msra.mxu0 %v529
        %614 = vmatprep.subr.mxu0 0.0
        %615 = vmatpush1.msra.mxu0 %v530
        %616 = vmatprep.subr.mxu0 0.0
        %617 = vmatpush1.msra.mxu0 0.0
        %618 = vmatprep.subr.mxu0 0.0
        %619 = vmatpush1.msra.mxu0 0.0
        %620 = vmatprep.subr.mxu0 0.0
        %621 = vmatpush1.msra.mxu0 0.0
        %622 = vmatprep.subr.mxu0 0.0
        %623 = vmatpush1.msra.mxu0 0.0
        %624 = vmatprep.subr.mxu0 0.0
        %625 = vmatpush1.msra.mxu0 0.0
        %626 = vmatprep.subr.mxu0 0.0
        %627 = vmatpush1.msra.mxu0 0.0
        %628 = vmatprep.subr.mxu0 0.0
        %629 = vmatpush1.msra.mxu0 0.0
        %630 = vmatprep.subr.mxu0 0.0
        %631 = vmatpush1.msra.mxu0 0.0
        %632 = vmatprep.subr.mxu0 0.0
        %633 = vmatpush1.msra.mxu0 0.0
        %634 = vmatprep.subr.mxu0 0.0
        %635 = vmatpush1.msra.mxu0 0.0
        %636 = vmatprep.subr.mxu0 0.0
        %637 = vmatpush1.msra.mxu0 0.0
        %638 = vmatprep.subr.mxu0 0.0
        %639 = vmatpush1.msra.mxu0 0.0
        %640 = vmatprep.subr.mxu0 0.0
        %641 = vmatpush1.msra.mxu0 0.0
        %642 = vmatprep.subr.mxu0 0.0
        %643 = vmatpush1.msra.mxu0 0.0
        %644 = vmatprep.subr.mxu0 0.0
        %645 = vmatpush1.msra.mxu0 0.0
        %646 = vmatprep.subr.mxu0 0.0
        %647 = vmatpush1.msra.mxu0 0.0
        %648 = vmatprep.subr.mxu0 0.0
        %649 = vmatpush1.msra.mxu0 0.0
        %650 = vmatprep.subr.mxu0 0.0
        %651 = vmatpush1.msra.mxu0 0.0
        %652 = vmatprep.subr.mxu0 0.0
        %653 = vmatpush1.msra.mxu0 0.0
        %654 = vmatprep.subr.mxu0 0.0
        %655 = vmatpush1.msra.mxu0 0.0
        %656 = vmatprep.subr.mxu0 0.0
        %657 = vmatpush1.msra.mxu0 0.0
        %658 = vmatprep.subr.mxu0 0.0
        %659 = vmatpush1.msra.mxu0 0.0
        %660 = vmatprep.subr.mxu0 0.0
        %661 = vmatpush1.msra.mxu0 0.0
        %662 = vmatprep.subr.mxu0 0.0
        %663 = vmatpush1.msra.mxu0 0.0
        %664 = vmatprep.subr.mxu0 0.0
        %665 = vmatpush1.msra.mxu0 0.0
        %666 = vmatprep.subr.mxu0 0.0
        %667 = vmatpush1.msra.mxu0 0.0
        %668 = vmatprep.subr.mxu0 0.0
        %669 = vmatpush1.msra.mxu0 0.0
        %670 = vmatprep.subr.mxu0 0.0
        %671 = vmatpush1.msra.mxu0 0.0
        %672 = vmatprep.mubr.f32.mxu0 0.0
        %673 = vmatmul.mubr.f32.gmra.mrb[0].mxu0 %v606
        %v674 = vpop.f32.mrb[0].mxu0
        %v675 = vadd.f32 %v602, %v674
        %v676 = vpop.f32.mrb[0].mxu0
        %677 = vdwg.mxu0
        %v678 = vld [vmem:[%s4] sm:$0x1]
        %v680 = vlaneseq
        %v681 = vshrl.u32 %v680, 7
        %v682 = vsub.s32 0, %v681
        %v683 = vrot.slane %v678, %v682
        %v685 = vadd.f32 %v675, %v683
        %v686 = vtanh.pop %v685
        %687 = vst.msk [vmem:[%s355] sm:$0xff] %vm365, %v686
        %688 = vst.msk [vmem:[%s362] sm:$0xff] %vm442, %v453
        %s689 = sand.u32 %s170, 1
        %s690 = scalar_lea.sflag [#allocation4], %s689
        %s691 = sand.u32 %s170, 1
        %s692 = smul.addr %s691, 8
        %s693 = scalar_lea.vmem [#allocation10], %s692
        %s694 = sand.u32 %s198, 1
        %s695 = scalar_lea.sflag [#allocation12], %s694
        %s696 = sand.u32 %s198, 1
        %s697 = smul.addr %s696, 8
        %s698 = scalar_lea.vmem [#allocation11], %s697
        // Predicated region
        $region57: #{tpu_custom_call.1} parent=39 // pred_check
          %p699 = pneg %p180
        $region58: #{tpu_custom_call.1} parent=39 // pred_check_branch
          %701 = sbr.rel (%p699) target = $region60
        $region59: #{tpu_custom_call.1} parent=39 // pred_region
          %s703 = ssub.s32 128, 128
          %704 = vsyncadd %s690, %s703
          %s705 = sadd.s32 %s36, %s35
          %s706 = smul.addr %s705, 128
          %s707 = scalar_lea.hbm %s5, %s706
          %s709 = sshll.u32 %s693, 4
          %s710 = int_to_ptr.vmem [resolvable:$true] %s709
          %712 = dma.vmem_to_hbm [thread:$0]  %s710, 128, %s707, %s690
        $region60: #{tpu_custom_call.1} parent=39 // pred_fallthru
          _
        // Predicated region
        $region61: #{tpu_custom_call.1} parent=39 // pred_check
          %p713 = pneg %p208
        $region62: #{tpu_custom_call.1} parent=39 // pred_check_branch
          %715 = sbr.rel (%p713) target = $region64
        $region63: #{tpu_custom_call.1} parent=39 // pred_region
          %s717 = ssub.s32 128, 128
          %718 = vsyncadd %s695, %s717
          %s719 = sadd.s32 %s36, %s35
          %s720 = smul.addr %s719, 128
          %s721 = scalar_lea.hbm %s6, %s720
          %s723 = sshll.u32 %s698, 4
          %s724 = int_to_ptr.vmem [resolvable:$true] %s723
          %726 = dma.vmem_to_hbm [thread:$0]  %s724, 128, %s721, %s695
        $region64: #{tpu_custom_call.1} parent=39 // pred_fallthru
          _
      $region40: #{tpu_custom_call.1} parent=5 // pred_fallthru
        _
      %p727 = scmp.le.s32.totalorder 2, %s26
      // Predicated region
      $region65: #{tpu_custom_call.1} parent=5 // pred_check
        %p728 = pneg %p727
      $region66: #{tpu_custom_call.1} parent=5 // pred_check_branch
        %730 = sbr.rel (%p728) target = $region68
      $region67: #{tpu_custom_call.1} parent=5 // pred_region
        %s731 = ssub.s32 %s26, 2
        // Predicated region
        $region69: #{tpu_custom_call.1} parent=67 // pred_check
          %p732 = pneg %p186
        $region70: #{tpu_custom_call.1} parent=67 // pred_check_branch
          %734 = sbr.rel (%p732) target = $region72
        $region71: #{tpu_custom_call.1} parent=67 // pred_region
          %s735 = sand.u32 %s171, 1
          %s736 = scalar_lea.sflag [#allocation4], %s735
          %s737 = sand.u32 %s171, 1
          %s738 = smul.addr %s737, 8
          %s739 = scalar_lea.vmem [#allocation10], %s738
          %740 = dma.done %s736, 128
        $region72: #{tpu_custom_call.1} parent=67 // pred_fallthru
          _
        // Predicated region
        $region73: #{tpu_custom_call.1} parent=67 // pred_check
          %p741 = pneg %p214
        $region74: #{tpu_custom_call.1} parent=67 // pred_check_branch
          %743 = sbr.rel (%p741) target = $region76
        $region75: #{tpu_custom_call.1} parent=67 // pred_region
          %s744 = sand.u32 %s199, 1
          %s745 = scalar_lea.sflag [#allocation12], %s744
          %s746 = sand.u32 %s199, 1
          %s747 = smul.addr %s746, 8
          %s748 = scalar_lea.vmem [#allocation11], %s747
          %749 = dma.done %s745, 128
        $region76: #{tpu_custom_call.1} parent=67 // pred_fallthru
          _
      $region68: #{tpu_custom_call.1} parent=5 // pred_fallthru
        _
    $region6: #{tpu_custom_call.1} parent=1 // loop_footer
      %s30 = sadd.s32 1, %s26
    $region7: #{tpu_custom_call.1} parent=1 // loop_footer_branch
      %25 = sbr.rel target = $region3
    $region8: #{tpu_custom_call.1} parent=1 // loop_exit
      _
    %750 = vsyncpa [#allocation3], 1
    %s751 = scalar_lea.sflag [#allocation3], 1
    %752 = vsyncpa %s751, 1
    %753 = vsyncpa [#allocation6], 1
    %s754 = scalar_lea.sflag [#allocation6], 1
    %755 = vsyncpa %s754, 1
    %756 = vsyncpa [#allocation9], 1
    %757 = vsyncpa [#allocation4], 1
    %s758 = scalar_lea.sflag [#allocation4], 1
    %759 = vsyncpa %s758, 1
    %760 = vsyncpa [#allocation12], 1
    %s761 = scalar_lea.sflag [#allocation12], 1
    %762 = vsyncpa %s761, 1

</llo_original>
